<compile_context>
chip_gen: v7x
topology: tpu7x:2x2x1
jax: 0.10.0
libtpu: 0.0.40
codegen_flags: <defaults>
</compile_context>

<pallas_src>
import functools

import jax
import jax.numpy as jnp
import numpy as np
from jax.experimental import pallas as pl
from jax.experimental.pallas import tpu as pltpu

_OUT_LANES = 128  # lane-dense output width (scores live in the first N columns)


def _round_up(x, m):
    return ((x + m - 1) // m) * m


def _diversity_kernel(tokens_ref, lengths_ref, out_ref, *, max_ngram_size, max_len):
    """Per-batch-tile diversity scores.

    tokens_ref : [TB, L]  int32   (sentence on sublanes, token position on lanes)
    lengths_ref: [TB, 1]  int32
    out_ref    : [TB, 128] float32 (column n-1 holds the ngram-size-n score)
    """
    tokens = tokens_ref[...]                   # [TB, L]
    lengths = lengths_ref[...]                 # [TB, 1]
    TB, L = tokens.shape
    N = max_ngram_size

    # Position index along the lane axis, hoisted once (mask compares are VALU).
    pos = jax.lax.broadcasted_iota(jnp.int32, (TB, L), 1)

    # dup[n-1][b, i] == 1 iff the n-gram of sentence b starting at position i is
    # identical to an n-gram starting at some earlier position i-d.
    zeros = jnp.zeros((TB, L), jnp.int32)
    init_dups = (zeros,) * N

    # Only distances d <= max_len - 1 can ever produce a duplicate at a valid
    # ngram start, so bound the loop by the true max sentence length.
    d_max = min(max_len, L) - 1

    def d_body(d, carry):
        rolled, dups = carry
        # rolled[b, i] == tokens[b, (i - d) mod L]; one lane roll per d step.
        rolled = pltpu.roll(rolled, shift=1, axis=1)
        # base[b, i] == 1 iff token i matches token i-d (wrap-around masked out).
        base = ((tokens == rolled) & (pos >= d)).astype(jnp.int32)
        running = base          # "ngram at i == ngram at i-d", extended as n grows
        shifted = base
        new_dups = [dups[0] | running]
        for n in range(2, N + 1):
            # shifted[b, i] == base[b, (i + n - 1) mod L]; wrapped lanes are only
            # ever read at positions the valid mask below discards.
            shifted = pltpu.roll(shifted, shift=L - 1, axis=1)
            running = running & shifted
            new_dups.append(dups[n - 1] | running)
        return rolled, tuple(new_dups)

    if d_max >= 1:
        _, dups = jax.lax.fori_loop(1, d_max + 1, d_body, (tokens, init_dups))
    else:
        dups = init_dups

    cols = []
    for n in range(1, N + 1):
        num = jnp.maximum(lengths - (n - 1), 0)                       # [TB, 1]
        valid = pos < num                                             # [TB, L]
        distinct = jnp.sum((valid & (dups[n - 1] == 0)).astype(jnp.float32),
                           axis=1, keepdims=True)                     # [TB, 1]
        total = num.astype(jnp.float32)
        cols.append(jnp.where(total > 0.0,
                              distinct / jnp.maximum(total, 1.0),
                              jnp.zeros_like(total)))
    # Lane-dense writeback: pad the N score columns to a full 128-lane block
    # (one-time per tile, keeps the store path unmasked).
    pad = jnp.zeros((TB, out_ref.shape[1] - N), jnp.float32)
    out_ref[...] = jnp.concatenate(cols + [pad], axis=1)


def diversity_pallas(tokens, lengths, max_ngram_size=4, max_len=None, batch_tile=None):
    """Returns (score, per_sentence_scores) matching Diversity.forward on
    token-id sentences.

    tokens : [B, L] int32 padded token ids.
    lengths: [B]    int32 true sentence lengths (<= L).
    max_len: static upper bound on the true sentence lengths (defaults to L);
             bounds the per-sentence O(N * max_len * L) work.
    """
    tokens = jnp.asarray(tokens, jnp.int32)
    lengths = jnp.asarray(lengths, jnp.int32).reshape(-1)
    B, L = tokens.shape
    N = int(max_ngram_size)
    if max_len is None:
        max_len = L
    max_len = max(1, min(int(max_len), L))

    # Pad the token axis to a lane multiple (canonical 128-lane rolls) and the
    # batch axis to the batch tile.  Padded sentences get length 0 -> score 0
    # and are sliced off below; padding tokens never reach a valid ngram start.
    L_pad = _round_up(L, 128)
    if batch_tile is None:
        # Largest tile that stays well under the 32 MiB scoped-VMEM default
        # (~10 live int32 [TB, L_pad] arrays + double-buffered I/O), v7x-safe.
        cap = 512 if L_pad <= 256 else (256 if L_pad <= 512 else 128)
        batch_tile = min(cap, _round_up(B, 8))
    TB = int(batch_tile)
    B_pad = _round_up(B, TB)

    tokens = jnp.pad(tokens, ((0, B_pad - B), (0, L_pad - L)))
    lengths2d = jnp.pad(lengths, ((0, B_pad - B),)).reshape(B_pad, 1)

    kernel = functools.partial(_diversity_kernel, max_ngram_size=N, max_len=max_len)

    out = pl.pallas_call(
        kernel,
        out_shape=jax.ShapeDtypeStruct((B_pad, _OUT_LANES), jnp.float32),
        grid_spec=pltpu.PrefetchScalarGridSpec(
            num_scalar_prefetch=0,
            grid=(B_pad // TB,),
            in_specs=[
                pl.BlockSpec((TB, L_pad), lambda i: (i, 0)),
                pl.BlockSpec((TB, 1), lambda i: (i, 0)),
            ],
            out_specs=pl.BlockSpec((TB, _OUT_LANES), lambda i: (i, 0)),
        ),
        compiler_params=pltpu.CompilerParams(
            dimension_semantics=("parallel",),
            vmem_limit_bytes=48 * 1024 * 1024,
        ),
    )(tokens, lengths2d)

    full = out[:B, :N]                 # [B, N]  (== torch full_scores.T)
    scores = full.mean(axis=1)         # per-sentence mean over ngram sizes
    score = scores.mean()              # scalar (float32 vs reference float64)
    return score, scores


def _reference_diversity(token_lists, max_ngram_size):
    """Pure-Python port of the PyTorch reference (on token-id sentences)."""
    full = np.zeros((max_ngram_size, len(token_lists)), dtype=np.float64)
    for n in range(1, max_ngram_size + 1):
        for i, sent in enumerate(token_lists):
            grams = [tuple(sent[j:j + n]) for j in range(len(sent) - n + 1)]
            if len(grams) == 0:
                full[n - 1, i] = 0.0
            else:
                full[n - 1, i] = len(set(grams)) / len(grams)
    scores = full.mean(axis=0)
    return float(scores.mean()), scores


if __name__ == "__main__":
    B, L = 8, 16            # 8 sentences, max 16 tokens each
    MAX_NGRAM = 4           # Diversity(max_ngram_size=4)
    VOCAB = 5               # small vocab so duplicate ngrams actually occur

    key = jax.random.PRNGKey(0)
    k_tok, k_len = jax.random.split(key)
    tokens = jax.random.randint(k_tok, (B, L), 0, VOCAB, dtype=jnp.int32)
    lengths = jax.random.randint(k_len, (B,), 2, L + 1, dtype=jnp.int32)

    # TODO(synk): string tokenization / hashing of the reference operates on
    # Python strings; here sentences must already be integer token ids.
    score, scores = diversity_pallas(
        tokens, lengths, max_ngram_size=MAX_NGRAM, max_len=int(jnp.max(lengths)))
    score = jax.block_until_ready(score)
    scores = jax.block_until_ready(scores)

    # Cross-check against a pure-Python port of the reference.
    tok_np = np.asarray(tokens)
    len_np = np.asarray(lengths)
    token_lists = [list(tok_np[b, : int(len_np[b])]) for b in range(B)]
    ref_score, ref_scores = _reference_diversity(token_lists, MAX_NGRAM)

    assert np.allclose(np.asarray(scores), ref_scores, atol=1e-5), (scores, ref_scores)
    assert np.isclose(float(score), ref_score, atol=1e-5), (score, ref_score)

    print("KERNEL_OK")
</pallas_src>

<mosaic_0001>
module attributes {stable_mosaic.version = 11 : i64} {
  func.func @_diversity_kernel(%arg0: i32, %arg1: memref<8x128xi32, #tpu.memory_space<vmem>>, %arg2: memref<8x1xi32, #tpu.memory_space<vmem>>, %arg3: memref<8x128xf32, #tpu.memory_space<vmem>>) attributes {dimension_semantics = [#tpu.dimension_semantics<parallel>], iteration_bounds = array<i64: 1>, scalar_prefetch = 0 : i64, scratch_operands = 0 : i64, tpu.core_type = #tpu.core_type<tc>, window_params = [{transform_indices = @transform_0, window_bounds = array<i64: 8, 128>}, {transform_indices = @transform_1, window_bounds = array<i64: 8, 1>}, {transform_indices = @transform_2, window_bounds = array<i64: 8, 128>}]} {
    %c0 = arith.constant 0 : index
    %c0_0 = arith.constant 0 : index
    %0 = vector.load %arg1[%c0, %c0_0] : memref<8x128xi32, #tpu.memory_space<vmem>>, vector<8x128xi32>
    %c0_1 = arith.constant 0 : index
    %c0_2 = arith.constant 0 : index
    %1 = vector.load %arg2[%c0_1, %c0_2] : memref<8x1xi32, #tpu.memory_space<vmem>>, vector<8x1xi32>
    %2 = tpu.iota {dimensions = array<i32: 1>} : vector<8x128xi32>
    %c0_i32 = arith.constant 0 : i32
    %3 = vector.broadcast %c0_i32 : i32 to vector<8x128xi32>
    %c1_i32 = arith.constant 1 : i32
    %c13_i32 = arith.constant 13 : i32
    %4 = arith.addi %c1_i32, %c13_i32 : i32
    %c1_i32_3 = arith.constant 1 : i32
    %5:5 = scf.for %arg4 = %c1_i32 to %4 step %c1_i32_3 iter_args(%arg5 = %0, %arg6 = %3, %arg7 = %3, %arg8 = %3, %arg9 = %3) -> (vector<8x128xi32>, vector<8x128xi32>, vector<8x128xi32>, vector<8x128xi32>, vector<8x128xi32>)  : i32 {
      %c1_i32_33 = arith.constant 1 : i32
      %93 = tpu.dynamic_rotate %arg5 by %c1_i32_33 dim 1 : vector<8x128xi32>, i32 -> vector<8x128xi32>
      %94 = arith.cmpi eq, %0, %93 : vector<8x128xi32>
      %95 = vector.broadcast %arg4 : i32 to vector<8x128xi32>
      %96 = arith.cmpi sge, %2, %95 : vector<8x128xi32>
      %97 = arith.andi %94, %96 : vector<8x128xi1>
      %98 = arith.extui %97 : vector<8x128xi1> to vector<8x128xi32>
      %99 = arith.ori %arg6, %98 : vector<8x128xi32>
      %c127_i32 = arith.constant 127 : i32
      %100 = tpu.dynamic_rotate %98 by %c127_i32 dim 1 : vector<8x128xi32>, i32 -> vector<8x128xi32>
      %101 = arith.andi %98, %100 : vector<8x128xi32>
      %102 = arith.ori %arg7, %101 : vector<8x128xi32>
      %c127_i32_34 = arith.constant 127 : i32
      %103 = tpu.dynamic_rotate %100 by %c127_i32_34 dim 1 : vector<8x128xi32>, i32 -> vector<8x128xi32>
      %104 = arith.andi %101, %103 : vector<8x128xi32>
      %105 = arith.ori %arg8, %104 : vector<8x128xi32>
      %c127_i32_35 = arith.constant 127 : i32
      %106 = tpu.dynamic_rotate %103 by %c127_i32_35 dim 1 : vector<8x128xi32>, i32 -> vector<8x128xi32>
      %107 = arith.andi %104, %106 : vector<8x128xi32>
      %108 = arith.ori %arg9, %107 : vector<8x128xi32>
      scf.yield %93, %99, %102, %105, %108 : vector<8x128xi32>, vector<8x128xi32>, vector<8x128xi32>, vector<8x128xi32>, vector<8x128xi32>
    }
    %c13_i32_4 = arith.constant 13 : i32
    %c0_i32_5 = arith.constant 0 : i32
    %6 = vector.broadcast %c0_i32_5 : i32 to vector<8x1xi32>
    %7 = arith.subi %1, %6 : vector<8x1xi32>
    %c0_i32_6 = arith.constant 0 : i32
    %8 = vector.broadcast %c0_i32_6 : i32 to vector<8x1xi32>
    %9 = arith.maxsi %7, %8 : vector<8x1xi32>
    %10 = vector.broadcast %9 : vector<8x1xi32> to vector<8x128xi32>
    %11 = arith.cmpi slt, %2, %10 : vector<8x128xi32>
    %c0_i32_7 = arith.constant 0 : i32
    %12 = vector.broadcast %c0_i32_7 : i32 to vector<8x128xi32>
    %13 = arith.cmpi eq, %5#1, %12 : vector<8x128xi32>
    %14 = arith.andi %11, %13 : vector<8x128xi1>
    %15 = arith.extui %14 : vector<8x128xi1> to vector<8x128xi32>
    %16 = arith.sitofp %15 : vector<8x128xi32> to vector<8x128xf32>
    %cst = arith.constant dense<0.000000e+00> : vector<8xf32>
    %17 = vector.multi_reduction <add>, %16, %cst [1] : vector<8x128xf32> to vector<8xf32>
    %18 = vector.shape_cast %17 : vector<8xf32> to vector<8x1xf32>
    %19 = arith.sitofp %9 : vector<8x1xi32> to vector<8x1xf32>
    %cst_8 = arith.constant 0.000000e+00 : f32
    %20 = vector.broadcast %cst_8 : f32 to vector<8x1xf32>
    %21 = arith.cmpf ogt, %19, %20 : vector<8x1xf32>
    %cst_9 = arith.constant 1.000000e+00 : f32
    %22 = vector.broadcast %cst_9 : f32 to vector<8x1xf32>
    %23 = arith.maximumf %19, %22 : vector<8x1xf32>
    %24 = arith.divf %18, %23 : vector<8x1xf32>
    %cst_10 = arith.constant 0.000000e+00 : f32
    %25 = vector.broadcast %cst_10 : f32 to vector<8x1xf32>
    %26 = arith.select %21, %24, %25 : vector<8x1xi1>, vector<8x1xf32>
    %c1_i32_11 = arith.constant 1 : i32
    %27 = vector.broadcast %c1_i32_11 : i32 to vector<8x1xi32>
    %28 = arith.subi %1, %27 : vector<8x1xi32>
    %c0_i32_12 = arith.constant 0 : i32
    %29 = vector.broadcast %c0_i32_12 : i32 to vector<8x1xi32>
    %30 = arith.maxsi %28, %29 : vector<8x1xi32>
    %31 = vector.broadcast %30 : vector<8x1xi32> to vector<8x128xi32>
    %32 = arith.cmpi slt, %2, %31 : vector<8x128xi32>
    %c0_i32_13 = arith.constant 0 : i32
    %33 = vector.broadcast %c0_i32_13 : i32 to vector<8x128xi32>
    %34 = arith.cmpi eq, %5#2, %33 : vector<8x128xi32>
    %35 = arith.andi %32, %34 : vector<8x128xi1>
    %36 = arith.extui %35 : vector<8x128xi1> to vector<8x128xi32>
    %37 = arith.sitofp %36 : vector<8x128xi32> to vector<8x128xf32>
    %cst_14 = arith.constant dense<0.000000e+00> : vector<8xf32>
    %38 = vector.multi_reduction <add>, %37, %cst_14 [1] : vector<8x128xf32> to vector<8xf32>
    %39 = vector.shape_cast %38 : vector<8xf32> to vector<8x1xf32>
    %40 = arith.sitofp %30 : vector<8x1xi32> to vector<8x1xf32>
    %cst_15 = arith.constant 0.000000e+00 : f32
    %41 = vector.broadcast %cst_15 : f32 to vector<8x1xf32>
    %42 = arith.cmpf ogt, %40, %41 : vector<8x1xf32>
    %cst_16 = arith.constant 1.000000e+00 : f32
    %43 = vector.broadcast %cst_16 : f32 to vector<8x1xf32>
    %44 = arith.maximumf %40, %43 : vector<8x1xf32>
    %45 = arith.divf %39, %44 : vector<8x1xf32>
    %cst_17 = arith.constant 0.000000e+00 : f32
    %46 = vector.broadcast %cst_17 : f32 to vector<8x1xf32>
    %47 = arith.select %42, %45, %46 : vector<8x1xi1>, vector<8x1xf32>
    %c2_i32 = arith.constant 2 : i32
    %48 = vector.broadcast %c2_i32 : i32 to vector<8x1xi32>
    %49 = arith.subi %1, %48 : vector<8x1xi32>
    %c0_i32_18 = arith.constant 0 : i32
    %50 = vector.broadcast %c0_i32_18 : i32 to vector<8x1xi32>
    %51 = arith.maxsi %49, %50 : vector<8x1xi32>
    %52 = vector.broadcast %51 : vector<8x1xi32> to vector<8x128xi32>
    %53 = arith.cmpi slt, %2, %52 : vector<8x128xi32>
    %c0_i32_19 = arith.constant 0 : i32
    %54 = vector.broadcast %c0_i32_19 : i32 to vector<8x128xi32>
    %55 = arith.cmpi eq, %5#3, %54 : vector<8x128xi32>
    %56 = arith.andi %53, %55 : vector<8x128xi1>
    %57 = arith.extui %56 : vector<8x128xi1> to vector<8x128xi32>
    %58 = arith.sitofp %57 : vector<8x128xi32> to vector<8x128xf32>
    %cst_20 = arith.constant dense<0.000000e+00> : vector<8xf32>
    %59 = vector.multi_reduction <add>, %58, %cst_20 [1] : vector<8x128xf32> to vector<8xf32>
    %60 = vector.shape_cast %59 : vector<8xf32> to vector<8x1xf32>
    %61 = arith.sitofp %51 : vector<8x1xi32> to vector<8x1xf32>
    %cst_21 = arith.constant 0.000000e+00 : f32
    %62 = vector.broadcast %cst_21 : f32 to vector<8x1xf32>
    %63 = arith.cmpf ogt, %61, %62 : vector<8x1xf32>
    %cst_22 = arith.constant 1.000000e+00 : f32
    %64 = vector.broadcast %cst_22 : f32 to vector<8x1xf32>
    %65 = arith.maximumf %61, %64 : vector<8x1xf32>
    %66 = arith.divf %60, %65 : vector<8x1xf32>
    %cst_23 = arith.constant 0.000000e+00 : f32
    %67 = vector.broadcast %cst_23 : f32 to vector<8x1xf32>
    %68 = arith.select %63, %66, %67 : vector<8x1xi1>, vector<8x1xf32>
    %c3_i32 = arith.constant 3 : i32
    %69 = vector.broadcast %c3_i32 : i32 to vector<8x1xi32>
    %70 = arith.subi %1, %69 : vector<8x1xi32>
    %c0_i32_24 = arith.constant 0 : i32
    %71 = vector.broadcast %c0_i32_24 : i32 to vector<8x1xi32>
    %72 = arith.maxsi %70, %71 : vector<8x1xi32>
    %73 = vector.broadcast %72 : vector<8x1xi32> to vector<8x128xi32>
    %74 = arith.cmpi slt, %2, %73 : vector<8x128xi32>
    %c0_i32_25 = arith.constant 0 : i32
    %75 = vector.broadcast %c0_i32_25 : i32 to vector<8x128xi32>
    %76 = arith.cmpi eq, %5#4, %75 : vector<8x128xi32>
    %77 = arith.andi %74, %76 : vector<8x128xi1>
    %78 = arith.extui %77 : vector<8x128xi1> to vector<8x128xi32>
    %79 = arith.sitofp %78 : vector<8x128xi32> to vector<8x128xf32>
    %cst_26 = arith.constant dense<0.000000e+00> : vector<8xf32>
    %80 = vector.multi_reduction <add>, %79, %cst_26 [1] : vector<8x128xf32> to vector<8xf32>
    %81 = vector.shape_cast %80 : vector<8xf32> to vector<8x1xf32>
    %82 = arith.sitofp %72 : vector<8x1xi32> to vector<8x1xf32>
    %cst_27 = arith.constant 0.000000e+00 : f32
    %83 = vector.broadcast %cst_27 : f32 to vector<8x1xf32>
    %84 = arith.cmpf ogt, %82, %83 : vector<8x1xf32>
    %cst_28 = arith.constant 1.000000e+00 : f32
    %85 = vector.broadcast %cst_28 : f32 to vector<8x1xf32>
    %86 = arith.maximumf %82, %85 : vector<8x1xf32>
    %87 = arith.divf %81, %86 : vector<8x1xf32>
    %cst_29 = arith.constant 0.000000e+00 : f32
    %88 = vector.broadcast %cst_29 : f32 to vector<8x1xf32>
    %89 = arith.select %84, %87, %88 : vector<8x1xi1>, vector<8x1xf32>
    %cst_30 = arith.constant 0.000000e+00 : f32
    %90 = vector.broadcast %cst_30 : f32 to vector<8x124xf32>
    %91 = tpu.concatenate %26, %47, %68, %89, %90 in 1 : vector<8x1xf32>, vector<8x1xf32>, vector<8x1xf32>, vector<8x1xf32>, vector<8x124xf32> -> vector<8x128xf32>
    %c0_31 = arith.constant 0 : index
    %c0_32 = arith.constant 0 : index
    %92 = vector.load %arg3[%c0_31, %c0_32] : memref<8x128xf32, #tpu.memory_space<vmem>>, vector<8x128xf32>
    tpu.vector_store %arg3[%c0_31, %c0_32], %91 {strides = array<i32>} : memref<8x128xf32, #tpu.memory_space<vmem>>, vector<8x128xf32>,
    return
  }
  func.func @transform_0(%arg0: i32) -> (i32, i32) {
    %c0_i32 = arith.constant 0 : i32
    %c0_i32_0 = arith.constant 0 : i32
    return %arg0, %c0_i32 : i32, i32
  }
  func.func @transform_1(%arg0: i32) -> (i32, i32) {
    %c0_i32 = arith.constant 0 : i32
    %c0_i32_0 = arith.constant 0 : i32
    return %arg0, %c0_i32 : i32, i32
  }
  func.func @transform_2(%arg0: i32) -> (i32, i32) {
    %c0_i32 = arith.constant 0 : i32
    %c0_i32_0 = arith.constant 0 : i32
    return %arg0, %c0_i32 : i32, i32
  }
}

</mosaic_0001>

<llo_original>
// kernel: tpu_custom_call.1
$region0: #{tpu_custom_call.1}
  #allocation0 [shape = 'u32[]', space=smem, size = 0x4, offset = 0x4, fixed_abs, tag = 'smem constant byte address 0x4 - core index']
  #allocation1 [shape = 'u32[144,128]{1,0:T(1,128)}', space=vmem, size = 0x12000, scoped, tag = 'internal scratch']
  %s0 = inlined_call_operand.vmem [shape: s32[8,128], index: 0, kind: input, shape index: {}]
  %s1 = inlined_call_operand.vmem [shape: s32[8,1], index: 1, kind: input, shape index: {}]
  %s2 = inlined_call_operand.hbm [shape: f32[8,128], index: 2, kind: output, shape index: {}]
  %s3 = sld [smem:[#allocation0]]
  $region25: #{tpu_custom_call.1} parent=0
    _
  %s5 = ssub.s32 1, %s3
  %s6 = scalar_select 0, %s5, %s3
  $region1: #{tpu_custom_call.1} parent=0
    #allocation2 [shape = 'u8[4096]{0}', space=vmem, size = 0x1000, scoped, tag = 'output window, operand 0, single buffered']
    #allocation3 [shape = 's32[1]{0}', space=sflag, size = 0x4, scoped, tag = 'scoped memory for tpu_custom_call.1']
    %7 = vsyncpa [#allocation3], 0
    // Predicated region
    $region2: #{tpu_custom_call.1} parent=1 // pred_check
      _
    $region3: #{tpu_custom_call.1} parent=1 // pred_check_branch
      %9 = sbr.rel (0) target = $region5
    $region4: #{tpu_custom_call.1} parent=1 // pred_region
      _
    $region5: #{tpu_custom_call.1} parent=1 // pred_fallthru
      _
    // Predicated region
    $region6: #{tpu_custom_call.1} parent=1 // pred_check
      _
    $region7: #{tpu_custom_call.1} parent=1 // pred_check_branch
      %11 = sbr.rel (0) target = $region9
    $region8: #{tpu_custom_call.1} parent=1 // pred_region
      _
    $region9: #{tpu_custom_call.1} parent=1 // pred_fallthru
      _
    %v12 = vld [vmem:[%s0] sm:$0xff]
    %v13 = vld [vmem:[%s1] sm:$0xff]
    %v14 = vlaneseq
    %v15 = vand.u32 %v14, 127
    loop: start=1, step=1, limit=14
    $region10: #{tpu_custom_call.1} parent=1 // loop_pre_header
      _
    $region11: #{tpu_custom_call.1} parent=1 // loop_header
      %s17 = sphi 1, %s21
      %p18 = scmp.ge.s32.totalorder %s17, 14
      %v22 = vphi %v12, %v28
      %v23 = vphi 0, %v34
      %v24 = vphi 0, %v38
      %v25 = vphi 0, %v42
      %v26 = vphi 0, %v46
    $region12: #{tpu_custom_call.1} parent=1 // loop_header_branch
      %20 = sbr.rel (%p18) target = $region16
    $region13: #{tpu_custom_call.1} parent=1 // loop_body
      %27 = vrot.lane.b32.xlu0 %v22, 1
      %v28 = vpop.permute.xlu0 %27
      %vm29 = vcmp.eq.s32.totalorder %v12, %v28
      %v30 = vstv %s17
      %vm31 = vcmp.ge.s32.totalorder %v15, %v30
      %vm32 = vmand %vm29, %vm31
      %v33 = vsel %vm32, 1, 0
      %v34 = vor.u32 %v23, %v33
      %35 = vrot.lane.b32.xlu0 %v33, 127
      %v36 = vpop.permute.xlu0 %35
      %v37 = vand.u32 %v33, %v36
      %v38 = vor.u32 %v24, %v37
      %39 = vrot.lane.b32.xlu0 %v36, 127
      %v40 = vpop.permute.xlu0 %39
      %v41 = vand.u32 %v37, %v40
      %v42 = vor.u32 %v25, %v41
      %43 = vrot.lane.b32.xlu0 %v40, 127
      %v44 = vpop.permute.xlu0 %43
      %v45 = vand.u32 %v41, %v44
      %v46 = vor.u32 %v26, %v45
    $region14: #{tpu_custom_call.1} parent=1 // loop_footer
      %s21 = sadd.s32 1, %s17
    $region15: #{tpu_custom_call.1} parent=1 // loop_footer_branch
      %16 = sbr.rel target = $region11
    $region16: #{tpu_custom_call.1} parent=1 // loop_exit
      _
    %vm47 = vcmp.gt.s32.totalorder %v13, 0
    %v48 = vsel %vm47, %v13, 0
    %49 = vset.pattern.permute.xlu0 0
    %50 = vperm.xlu0 %49, %v48
    %v51 = vpop.permute.xlu0 %50
    %vm52 = vcmp.lt.s32.totalorder %v15, %v51
    %vm53 = vcmp.eq.s32.totalorder %v23, 0
    %vm54 = vmand %vm52, %vm53
    %v55 = vsel %vm54, 1, 0
    %v56 = vcvt.s32.f32 %v55
    %57 = vadd.xlane.f32.xlu0 %v56
    %v58 = vpop.xlane.xlu0 %57
    %v59 = vcvt.s32.f32 %v48
    %vm60 = vcmp.gt.f32.partialorder %v59, 0.0
    %v61 = vmax.f32 %v59, 1.0
    %v62 = vrcp.pop %v61
    %v63 = vmul.f32 %v58, %v62
    %v64 = vsel %vm60, %v63, 0.0
    %v65 = vsub.s32 %v13, 1
    %vm66 = vcmp.gt.s32.totalorder %v65, 0
    %v67 = vsel %vm66, %v65, 0
    %68 = vset.pattern.permute.xlu0 0
    %69 = vperm.xlu0 %68, %v67
    %v70 = vpop.permute.xlu0 %69
    %vm71 = vcmp.lt.s32.totalorder %v15, %v70
    %vm72 = vcmp.eq.s32.totalorder %v24, 0
    %vm73 = vmand %vm71, %vm72
    %v74 = vsel %vm73, 1, 0
    %v75 = vcvt.s32.f32 %v74
    %76 = vadd.xlane.f32.xlu0 %v75
    %v77 = vpop.xlane.xlu0 %76
    %v78 = vcvt.s32.f32 %v67
    %vm79 = vcmp.gt.f32.partialorder %v78, 0.0
    %v80 = vmax.f32 %v78, 1.0
    %v81 = vrcp.pop %v80
    %v82 = vmul.f32 %v77, %v81
    %v83 = vsel %vm79, %v82, 0.0
    %v84 = vsub.s32 %v13, 2
    %vm85 = vcmp.gt.s32.totalorder %v84, 0
    %v86 = vsel %vm85, %v84, 0
    %87 = vset.pattern.permute.xlu0 0
    %88 = vperm.xlu0 %87, %v86
    %v89 = vpop.permute.xlu0 %88
    %vm90 = vcmp.lt.s32.totalorder %v15, %v89
    %vm91 = vcmp.eq.s32.totalorder %v25, 0
    %vm92 = vmand %vm90, %vm91
    %v93 = vsel %vm92, 1, 0
    %v94 = vcvt.s32.f32 %v93
    %95 = vadd.xlane.f32.xlu0 %v94
    %v96 = vpop.xlane.xlu0 %95
    %v97 = vcvt.s32.f32 %v86
    %vm98 = vcmp.gt.f32.partialorder %v97, 0.0
    %v99 = vmax.f32 %v97, 1.0
    %v100 = vrcp.pop %v99
    %v101 = vmul.f32 %v96, %v100
    %v102 = vsel %vm98, %v101, 0.0
    %v103 = vsub.s32 %v13, 3
    %vm104 = vcmp.gt.s32.totalorder %v103, 0
    %v105 = vsel %vm104, %v103, 0
    %106 = vset.pattern.permute.xlu0 0
    %107 = vperm.xlu0 %106, %v105
    %v108 = vpop.permute.xlu0 %107
    %vm109 = vcmp.lt.s32.totalorder %v15, %v108
    %vm110 = vcmp.eq.s32.totalorder %v26, 0
    %vm111 = vmand %vm109, %vm110
    %v112 = vsel %vm111, 1, 0
    %v113 = vcvt.s32.f32 %v112
    %114 = vadd.xlane.f32.xlu0 %v113
    %v115 = vpop.xlane.xlu0 %114
    %v116 = vcvt.s32.f32 %v105
    %vm117 = vcmp.gt.f32.partialorder %v116, 0.0
    %v118 = vmax.f32 %v116, 1.0
    %v119 = vrcp.pop %v118
    %v120 = vmul.f32 %v115, %v119
    %v121 = vsel %vm117, %v120, 0.0
    %123 = vrot.lane.b32.xlu0 %v83, 1
    %v124 = vpop.permute.xlu0 %123
    %127 = vrot.lane.b32.xlu0 %v102, 2
    %v128 = vpop.permute.xlu0 %127
    %131 = vrot.lane.b32.xlu0 %v121, 3
    %v132 = vpop.permute.xlu0 %131
    %vm134 = vcmask 7168
    %v135 = vsel %vm134, %v64, %v124
    %vm136 = vcmask 15360
    %v137 = vsel %vm136, %v135, %v128
    %vm138 = vcmask 23552
    %v139 = vsel %vm138, %v137, %v132
    %vm140 = vcmask 31744
    %v141 = vsel %vm140, %v139, 0.0
    %142 = vst [vmem:[#allocation2] sm:$0xff] %v141
    // Predicated region
    $region17: #{tpu_custom_call.1} parent=1 // pred_check
      _
    $region18: #{tpu_custom_call.1} parent=1 // pred_check_branch
      %144 = sbr.rel (0) target = $region20
    $region19: #{tpu_custom_call.1} parent=1 // pred_region
      %s146 = ssub.s32 128, 128
      %147 = vsyncadd [#allocation3], %s146
      %s149 = sshll.u32 [#allocation2], 4
      %s150 = int_to_ptr.vmem [resolvable:$true] %s149
      %152 = dma.vmem_to_hbm [thread:$0]  %s150, 128, %s2, [#allocation3]
    $region20: #{tpu_custom_call.1} parent=1 // pred_fallthru
      _
    // Predicated region
    $region21: #{tpu_custom_call.1} parent=1 // pred_check
      _
    $region22: #{tpu_custom_call.1} parent=1 // pred_check_branch
      %154 = sbr.rel (0) target = $region24
    $region23: #{tpu_custom_call.1} parent=1 // pred_region
      %155 = dma.done [#allocation3], 128
    $region24: #{tpu_custom_call.1} parent=1 // pred_fallthru
      _
    %156 = vsyncpa [#allocation3], 1

</llo_original>
